<compile_context>
chip_gen: v6e
topology: v6e:2x2x1
jax: 0.10.0
libtpu: 0.0.40
codegen_flags: <defaults>
</compile_context>

<pallas_src>
import jax
import jax.numpy as jnp
from jax.experimental import pallas as pl
from jax.experimental.pallas import tpu as pltpu

_LANE = 128


def _round_up(x, m):
    return ((x + m - 1) // m) * m


def _make_dnn_kernel(num_hidden_layers: int, compute_dtype):
    """Pallas kernel: `num_hidden_layers` (Linear+ReLU) layers + final Linear(out=1)."""

    def kernel(*refs):
        # refs = [x, w0, b0, ..., w_{L-1}, b_{L-1}, wf_row, bf, out]
        x_ref = refs[0]
        out_ref = refs[-1]
        param_refs = refs[1:-1]

        h = x_ref[...]                            # (bt, d0), compute_dtype
        for li in range(num_hidden_layers):
            w = param_refs[2 * li][...]           # (pd_in, pd_out), compute_dtype
            b = param_refs[2 * li + 1][...]       # (1, pd_out), f32
            z = jnp.dot(h.astype(compute_dtype), w,
                        preferred_element_type=jnp.float32) + b
            h = jnp.maximum(z, 0.0)               # bias-add + ReLU in f32 (VPU)

        # dropout(p=0.0) == identity (eval semantics).
        # TODO(synk): stochastic dropout (p>0, training mode) would need pltpu.prng_* masking.

        wf = param_refs[-2][...]                  # (1, pd_last) f32, zeros in padded lanes
        bf = param_refs[-1][...]                  # (1, 1) f32
        # final_linear has a single output unit -> VPU multiply + lane reduction
        # instead of a degenerate (K,1) MXU matmul.
        y = jnp.sum(h.astype(jnp.float32) * wf, axis=-1, keepdims=True) + bf
        out_ref[...] = y.astype(out_ref.dtype)

    return kernel


def _pick_batch_tile(B, sublane):
    """grid=1 for small batches; 512-2048-row tiles (even #steps for v7x) otherwise."""
    if B <= 512:
        return B
    for tile in (2048, 1024, 512):
        if B % tile == 0 and (B // tile) % 2 == 0:   # even #steps -> both v7x TCs busy
            return tile
    for tile in (2048, 1024, 512):
        if B % tile == 0:
            return tile
    hi = (min(B, 4096) // sublane) * sublane
    for tile in range(hi, sublane - 1, -sublane):
        if B % tile == 0:
            return tile
    return B


def dnn_forward(x, weights, biases, *, batch_tile=None, compute_dtype=jnp.bfloat16):
    """Run the Dnn forward pass as a single fused Pallas kernel.

    x:       (B, hidden_units[0]) array.
    weights: list of (in_i, out_i) arrays (already transposed vs torch's (out, in)).
    biases:  list of (out_i,) arrays.
    The last (weights[-1], biases[-1]) pair is final_linear (out == 1).
    Output is (B, 1) float32.
    """
    B, in_dim = x.shape
    num_hidden = len(weights) - 1
    assert weights[-1].shape[1] == 1, "final_linear must have a single output unit"
    out_dim = 1

    x_dtype = jnp.dtype(compute_dtype)
    sublane = max(8, 32 // x_dtype.itemsize)      # 8 for f32, 16 for bf16

    # --- lane-pad hidden widths to multiples of 128 (full MXU tiles; exact) ----
    hidden_out = [w.shape[1] for w in weights[:-1]]
    padded_out = [_round_up(d, _LANE) for d in hidden_out]
    in_widths = [in_dim] + padded_out             # input width of hidden layer i

    padded_weights, padded_biases = [], []
    for li in range(num_hidden):
        w, b = weights[li], biases[li]
        pin, pout = in_widths[li], padded_out[li]
        wp = jnp.zeros((pin, pout), compute_dtype)
        wp = wp.at[: w.shape[0], : w.shape[1]].set(w.astype(compute_dtype))
        bp = jnp.zeros((1, pout), jnp.float32)
        bp = bp.at[0, : b.shape[0]].set(b.astype(jnp.float32))
        padded_weights.append(wp)
        padded_biases.append(bp)

    last_width = padded_out[-1] if num_hidden > 0 else in_dim
    wf, bf = weights[-1], biases[-1]
    wf_row = jnp.zeros((1, last_width), jnp.float32)
    wf_row = wf_row.at[0, : wf.shape[0]].set(wf[:, 0].astype(jnp.float32))
    bf_2d = bf.astype(jnp.float32).reshape(1, 1)

    # --- batch tiling ----------------------------------------------------------
    if batch_tile is None:
        batch_tile = _pick_batch_tile(B, sublane)
    assert B % batch_tile == 0, "batch must be divisible by batch_tile"
    assert batch_tile == B or batch_tile % sublane == 0, (
        f"batch_tile must be a multiple of {sublane} for {x_dtype.name} "
        "unless it covers the whole batch")

    # --- per-generation VMEM budget (v7x: 64 MiB physical, v5e/v6e: 128 MiB) ---
    try:
        vmem_cap = int(pltpu.get_tpu_info().vmem_capacity_bytes)
    except Exception:
        vmem_cap = 64 * 1024 * 1024               # conservative v7x fallback
    vmem_budget = (vmem_cap * 3) // 4

    param_bytes = sum(int(w.size) * w.dtype.itemsize for w in padded_weights)
    param_bytes += sum(int(b.size) * 4 for b in padded_biases)
    param_bytes += int(wf_row.size) * 4 + int(bf_2d.size) * 4
    max_width = max([in_dim] + padded_out + [last_width])

    def _footprint(tile):
        f = 2 * tile * in_dim * x_dtype.itemsize   # x tile (double-buffered)
        f += 2 * tile * out_dim * 4                # out tile (double-buffered)
        f += 2 * param_bytes                       # params (pipeline keeps 2 bufs)
        f += 4 * tile * max_width * 4              # live f32 activations / temps
        return f

    while (_footprint(batch_tile) > vmem_budget
           and batch_tile % (2 * sublane) == 0
           and B % (batch_tile // 2) == 0):
        batch_tile //= 2

    grid = (B // batch_tile,)

    # --- specs -----------------------------------------------------------------
    in_specs = [pl.BlockSpec((batch_tile, in_dim), lambda i: (i, 0))]
    flat_params = []
    for wp, bp in zip(padded_weights, padded_biases):
        in_specs.append(pl.BlockSpec(wp.shape, lambda i: (0, 0)))
        in_specs.append(pl.BlockSpec(bp.shape, lambda i: (0, 0)))
        flat_params.extend((wp, bp))
    in_specs.append(pl.BlockSpec(wf_row.shape, lambda i: (0, 0)))
    in_specs.append(pl.BlockSpec(bf_2d.shape, lambda i: (0, 0)))
    flat_params.extend((wf_row, bf_2d))

    out_spec = pl.BlockSpec((batch_tile, out_dim), lambda i: (i, 0))

    # --- cost estimate (lets XLA schedule/overlap the custom call) --------------
    flops = 0
    k = in_dim
    for pout in padded_out:
        flops += 2 * B * k * pout
        k = pout
    flops += 2 * B * last_width * out_dim
    bytes_accessed = B * in_dim * x_dtype.itemsize + B * out_dim * 4 + param_bytes
    cost = pl.CostEstimate(flops=flops, transcendentals=0,
                           bytes_accessed=bytes_accessed)

    kernel = _make_dnn_kernel(num_hidden, compute_dtype)
    fn = pl.pallas_call(
        kernel,
        out_shape=jax.ShapeDtypeStruct((B, out_dim), jnp.float32),
        grid_spec=pltpu.PrefetchScalarGridSpec(
            num_scalar_prefetch=0,
            grid=grid,
            in_specs=in_specs,
            out_specs=out_spec,
        ),
        compiler_params=pltpu.CompilerParams(
            dimension_semantics=("parallel",),
            vmem_limit_bytes=vmem_budget,
        ),
        cost_estimate=cost,
    )
    return fn(x.astype(compute_dtype), *flat_params)


def dnn_reference(x, weights, biases, *, compute_dtype=jnp.float32):
    """Pure-JAX reference mirroring the PyTorch forward.

    With compute_dtype=bf16 it reproduces the kernel's precision (bf16 matmul
    inputs, f32 accumulation, f32 final layer); with f32 it is the exact
    PyTorch-equivalent math.
    """
    h = x.astype(compute_dtype)
    for w, b in zip(weights[:-1], biases[:-1]):
        z = jnp.dot(h.astype(compute_dtype), w.astype(compute_dtype),
                    preferred_element_type=jnp.float32) + b.astype(jnp.float32)
        h = jnp.maximum(z, 0.0)
    # dropout p=0.0 -> identity; final_linear in f32
    return jnp.dot(h.astype(jnp.float32), weights[-1].astype(jnp.float32)) + (
        biases[-1].astype(jnp.float32))


def init_dnn_params(key, hidden_units):
    """Deterministic init matching torch.nn.Linear default (U[-1/sqrt(fan_in), +]).

    Returns weights in (in, out) layout (transposed vs. torch's (out, in)).
    """
    layer_dims = list(zip(hidden_units[:-1], hidden_units[1:])) + [(hidden_units[-1], 1)]
    weights, biases = [], []
    for (fan_in, fan_out) in layer_dims:
        key, kw, kb = jax.random.split(key, 3)
        bound = 1.0 / (fan_in ** 0.5)
        w = jax.random.uniform(kw, (fan_in, fan_out), jnp.float32, -bound, bound)
        b = jax.random.uniform(kb, (fan_out,), jnp.float32, -bound, bound)
        weights.append(w)
        biases.append(b)
    return weights, biases


if __name__ == "__main__":
    key = jax.random.PRNGKey(0)

    # Small shapes consistent with the module: hidden_units = [32, 64, 32], batch = 16.
    hidden_units = [32, 64, 32]
    batch = 16

    key, kx = jax.random.split(key)
    x = jax.random.normal(kx, (batch, hidden_units[0]), jnp.float32)

    weights, biases = init_dnn_params(key, hidden_units)

    # batch_tile defaults to the whole (small) batch -> single grid step.
    out = dnn_forward(x, weights, biases)
    out = jax.block_until_ready(out)

    ref_matched = dnn_reference(x, weights, biases, compute_dtype=jnp.bfloat16)
    ref_f32 = dnn_reference(x, weights, biases, compute_dtype=jnp.float32)

    assert out.shape == (batch, 1), out.shape
    assert jnp.allclose(out, ref_matched, atol=2e-3, rtol=2e-3), (
        f"max abs err vs matched-precision ref = {jnp.max(jnp.abs(out - ref_matched))}"
    )
    assert jnp.allclose(out, ref_f32, atol=1e-1, rtol=1e-1), (
        f"max abs err vs f32 ref = {jnp.max(jnp.abs(out - ref_f32))}"
    )

    print("KERNEL_OK")
</pallas_src>

<mosaic_0001>
module attributes {stable_mosaic.version = 11 : i64} {
  func.func @kernel(%arg0: i32, %arg1: memref<16x32xbf16, #tpu.memory_space<vmem>>, %arg2: memref<32x128xbf16, #tpu.memory_space<vmem>>, %arg3: memref<1x128xf32, #tpu.memory_space<vmem>>, %arg4: memref<128x128xbf16, #tpu.memory_space<vmem>>, %arg5: memref<1x128xf32, #tpu.memory_space<vmem>>, %arg6: memref<1x128xf32, #tpu.memory_space<vmem>>, %arg7: memref<1x1xf32, #tpu.memory_space<vmem>>, %arg8: memref<16x1xf32, #tpu.memory_space<vmem>>) attributes {dimension_semantics = [#tpu.dimension_semantics<parallel>], iteration_bounds = array<i64: 1>, scalar_prefetch = 0 : i64, scratch_operands = 0 : i64, tpu.core_type = #tpu.core_type<tc>, window_params = [{transform_indices = @transform_0, window_bounds = array<i64: 16, 32>}, {pipeline_mode = #tpu.pipeline_mode<synchronous>, transform_indices = @transform_1, window_bounds = array<i64: 32, 128>}, {pipeline_mode = #tpu.pipeline_mode<synchronous>, transform_indices = @transform_2, window_bounds = array<i64: 1, 128>}, {pipeline_mode = #tpu.pipeline_mode<synchronous>, transform_indices = @transform_3, window_bounds = array<i64: 128, 128>}, {pipeline_mode = #tpu.pipeline_mode<synchronous>, transform_indices = @transform_4, window_bounds = array<i64: 1, 128>}, {pipeline_mode = #tpu.pipeline_mode<synchronous>, transform_indices = @transform_5, window_bounds = array<i64: 1, 128>}, {pipeline_mode = #tpu.pipeline_mode<synchronous>, transform_indices = @transform_6, window_bounds = array<i64: 1, 1>}, {transform_indices = @transform_7, window_bounds = array<i64: 16, 1>}]} {
    %c0 = arith.constant 0 : index
    %c0_0 = arith.constant 0 : index
    %0 = vector.load %arg1[%c0, %c0_0] : memref<16x32xbf16, #tpu.memory_space<vmem>>, vector<16x32xbf16>
    %c0_1 = arith.constant 0 : index
    %c0_2 = arith.constant 0 : index
    %1 = vector.load %arg2[%c0_1, %c0_2] : memref<32x128xbf16, #tpu.memory_space<vmem>>, vector<32x128xbf16>
    %c0_3 = arith.constant 0 : index
    %c0_4 = arith.constant 0 : index
    %2 = vector.load %arg3[%c0_3, %c0_4] : memref<1x128xf32, #tpu.memory_space<vmem>>, vector<1x128xf32>
    %cst = arith.constant dense<0.000000e+00> : vector<16x128xf32>
    %3 = tpu.matmul %0, %1, %cst {dimension_numbers = #tpu.dot_dimension_numbers<[1], [0], [0], [1], [0, 0, 1, 1], [], []>} : vector<16x32xbf16>, vector<32x128xbf16>, vector<16x128xf32> -> vector<16x128xf32>
    %4 = vector.broadcast %2 : vector<1x128xf32> to vector<16x128xf32>
    %5 = arith.addf %3, %4 : vector<16x128xf32>
    %cst_5 = arith.constant 0.000000e+00 : f32
    %6 = vector.broadcast %cst_5 : f32 to vector<16x128xf32>
    %7 = arith.maximumf %5, %6 : vector<16x128xf32>
    %c0_6 = arith.constant 0 : index
    %c0_7 = arith.constant 0 : index
    %8 = vector.load %arg4[%c0_6, %c0_7] : memref<128x128xbf16, #tpu.memory_space<vmem>>, vector<128x128xbf16>
    %c0_8 = arith.constant 0 : index
    %c0_9 = arith.constant 0 : index
    %9 = vector.load %arg5[%c0_8, %c0_9] : memref<1x128xf32, #tpu.memory_space<vmem>>, vector<1x128xf32>
    %10 = arith.truncf %7 : vector<16x128xf32> to vector<16x128xbf16>
    %cst_10 = arith.constant dense<0.000000e+00> : vector<16x128xf32>
    %11 = tpu.matmul %10, %8, %cst_10 {dimension_numbers = #tpu.dot_dimension_numbers<[1], [0], [0], [1], [0, 0, 1, 1], [], []>} : vector<16x128xbf16>, vector<128x128xbf16>, vector<16x128xf32> -> vector<16x128xf32>
    %12 = vector.broadcast %9 : vector<1x128xf32> to vector<16x128xf32>
    %13 = arith.addf %11, %12 : vector<16x128xf32>
    %cst_11 = arith.constant 0.000000e+00 : f32
    %14 = vector.broadcast %cst_11 : f32 to vector<16x128xf32>
    %15 = arith.maximumf %13, %14 : vector<16x128xf32>
    %c0_12 = arith.constant 0 : index
    %c0_13 = arith.constant 0 : index
    %16 = vector.load %arg6[%c0_12, %c0_13] : memref<1x128xf32, #tpu.memory_space<vmem>>, vector<1x128xf32>
    %c0_14 = arith.constant 0 : index
    %c0_15 = arith.constant 0 : index
    %17 = vector.load %arg7[%c0_14, %c0_15] : memref<1x1xf32, #tpu.memory_space<vmem>>, vector<1x1xf32>
    %18 = vector.broadcast %16 : vector<1x128xf32> to vector<16x128xf32>
    %19 = arith.mulf %15, %18 : vector<16x128xf32>
    %cst_16 = arith.constant dense<0.000000e+00> : vector<16xf32>
    %20 = vector.multi_reduction <add>, %19, %cst_16 [1] : vector<16x128xf32> to vector<16xf32>
    %21 = vector.shape_cast %20 : vector<16xf32> to vector<16x1xf32>
    %22 = vector.broadcast %17 : vector<1x1xf32> to vector<16x1xf32>
    %23 = arith.addf %21, %22 : vector<16x1xf32>
    %c0_17 = arith.constant 0 : index
    %c0_18 = arith.constant 0 : index
    %24 = vector.load %arg8[%c0_17, %c0_18] : memref<16x1xf32, #tpu.memory_space<vmem>>, vector<16x1xf32>
    tpu.vector_store %arg8[%c0_17, %c0_18], %23 {strides = array<i32>} : memref<16x1xf32, #tpu.memory_space<vmem>>, vector<16x1xf32>,
    return
  }
  func.func @transform_0(%arg0: i32) -> (i32, i32) {
    %c0_i32 = arith.constant 0 : i32
    %c0_i32_0 = arith.constant 0 : i32
    return %arg0, %c0_i32 : i32, i32
  }
  func.func @transform_1(%arg0: i32) -> (i32, i32) {
    %c0_i32 = arith.constant 0 : i32
    %c0_i32_0 = arith.constant 0 : i32
    %c0_i32_1 = arith.constant 0 : i32
    return %c0_i32, %c0_i32_0 : i32, i32
  }
  func.func @transform_2(%arg0: i32) -> (i32, i32) {
    %c0_i32 = arith.constant 0 : i32
    %c0_i32_0 = arith.constant 0 : i32
    %c0_i32_1 = arith.constant 0 : i32
    return %c0_i32, %c0_i32_0 : i32, i32
  }
  func.func @transform_3(%arg0: i32) -> (i32, i32) {
    %c0_i32 = arith.constant 0 : i32
    %c0_i32_0 = arith.constant 0 : i32
    %c0_i32_1 = arith.constant 0 : i32
    return %c0_i32, %c0_i32_0 : i32, i32
  }
  func.func @transform_4(%arg0: i32) -> (i32, i32) {
    %c0_i32 = arith.constant 0 : i32
    %c0_i32_0 = arith.constant 0 : i32
    %c0_i32_1 = arith.constant 0 : i32
    return %c0_i32, %c0_i32_0 : i32, i32
  }
  func.func @transform_5(%arg0: i32) -> (i32, i32) {
    %c0_i32 = arith.constant 0 : i32
    %c0_i32_0 = arith.constant 0 : i32
    %c0_i32_1 = arith.constant 0 : i32
    return %c0_i32, %c0_i32_0 : i32, i32
  }
  func.func @transform_6(%arg0: i32) -> (i32, i32) {
    %c0_i32 = arith.constant 0 : i32
    %c0_i32_0 = arith.constant 0 : i32
    %c0_i32_1 = arith.constant 0 : i32
    return %c0_i32, %c0_i32_0 : i32, i32
  }
  func.func @transform_7(%arg0: i32) -> (i32, i32) {
    %c0_i32 = arith.constant 0 : i32
    %c0_i32_0 = arith.constant 0 : i32
    return %arg0, %c0_i32 : i32, i32
  }
}

</mosaic_0001>

<llo_original>
// kernel: tpu_custom_call.1
$region0: #{tpu_custom_call.1}
  #allocation0 [shape = 'u32[]', space=smem, size = 0x4, offset = 0x4, fixed_abs, tag = 'smem constant byte address 0x4 - core index']
  #allocation1 [shape = 'u32[144,128]{1,0:T(1,128)}', space=vmem, size = 0x12000, scoped, tag = 'internal scratch']
  #allocation2 [shape = 'f32[1,1]{1,0:T(1,128)S(1)}', space=vmem, size = 0x200, scoped, tag = 'scoped memory for tpu_custom_call.1']
  %s0 = inlined_call_operand.hbm [shape: bf16[16,32], index: 0, kind: input, shape index: {}]
  %s1 = inlined_call_operand.hbm [shape: bf16[32,128], index: 1, kind: input, shape index: {}]
  %s2 = inlined_call_operand.vmem [shape: f32[1,128], index: 2, kind: input, shape index: {}]
  %s3 = inlined_call_operand.hbm [shape: bf16[128,128], index: 3, kind: input, shape index: {}]
  %s4 = inlined_call_operand.vmem [shape: f32[1,128], index: 4, kind: input, shape index: {}]
  %s5 = inlined_call_operand.vmem [shape: f32[1,128], index: 5, kind: input, shape index: {}]
  %s6 = inlined_call_operand.<no memory space> [shape: f32[1,1], index: 6, kind: input, shape index: {}]
  %s7 = inlined_call_operand.vmem [shape: f32[16,1], index: 7, kind: output, shape index: {}]
  %s8 = sld [smem:[#allocation0]]
  $region50: #{tpu_custom_call.1} parent=0
    _
  %s10 = ssub.s32 1, %s8
  %s11 = scalar_select 0, %s10, %s8
  %v12 = vstv %s6
  %13 = vst [vmem:[#allocation2] sm:$0x1] %v12
  $region1: #{tpu_custom_call.1} parent=0
    #allocation3 [shape = 'u8[4096]{0}', space=vmem, size = 0x1000, scoped, tag = 'input window, operand 0, single buffered']
    #allocation4 [shape = 's32[1]{0}', space=sflag, size = 0x4, scoped, tag = 'scoped memory for tpu_custom_call.1']
    #allocation5 [shape = 'u8[8192]{0}', space=vmem, size = 0x2000, scoped, tag = 'input window, operand 1, single buffered']
    #allocation6 [shape = 's32[1]{0}', space=sflag, size = 0x4, scoped, tag = 'scoped memory for tpu_custom_call.1']
    #allocation7 [shape = 'u8[32768]{0}', space=vmem, size = 0x8000, scoped, tag = 'input window, operand 3, single buffered']
    %14 = vsyncpa [#allocation4], 0
    %15 = vsyncpa [#allocation6], 0
    // Predicated region
    $region2: #{tpu_custom_call.1} parent=1 // pred_check
      _
    $region3: #{tpu_custom_call.1} parent=1 // pred_check_branch
      %17 = sbr.rel (0) target = $region5
    $region4: #{tpu_custom_call.1} parent=1 // pred_region
      %s19 = ssub.s32 128, 128
      %20 = vsyncadd [#allocation4], %s19
      %s21 = sshll.u32 [#allocation3], 4
      %s22 = int_to_ptr.vmem [resolvable:$true] %s21
      %27 = dma.hbm_to_vmem [thread:$0]  %s0, 128, %s22, [#allocation4], 64, 64, 4
    $region5: #{tpu_custom_call.1} parent=1 // pred_fallthru
      _
    // Predicated region
    $region6: #{tpu_custom_call.1} parent=1 // pred_check
      _
    $region7: #{tpu_custom_call.1} parent=1 // pred_check_branch
      %29 = sbr.rel (0) target = $region9
    $region8: #{tpu_custom_call.1} parent=1 // pred_region
      %s31 = ssub.s32 256, 256
      %32 = vsyncadd [#allocation6], %s31
      %s33 = sshll.u32 [#allocation5], 4
      %s34 = int_to_ptr.vmem [resolvable:$true] %s33
      %39 = dma.hbm_to_vmem [thread:$0]  %s1, 256, %s34, [#allocation6], 64, 64, 4
    $region9: #{tpu_custom_call.1} parent=1 // pred_fallthru
      _
    // Predicated region
    $region10: #{tpu_custom_call.1} parent=1 // pred_check
      _
    $region11: #{tpu_custom_call.1} parent=1 // pred_check_branch
      %41 = sbr.rel (0) target = $region13
    $region12: #{tpu_custom_call.1} parent=1 // pred_region
      _
    $region13: #{tpu_custom_call.1} parent=1 // pred_fallthru
      _
    // Predicated region
    $region14: #{tpu_custom_call.1} parent=1 // pred_check
      _
    $region15: #{tpu_custom_call.1} parent=1 // pred_check_branch
      %43 = sbr.rel (0) target = $region17
    $region16: #{tpu_custom_call.1} parent=1 // pred_region
      %s45 = ssub.s32 1024, 1024
      %46 = vsyncadd [#allocation6], %s45
      %s47 = sshll.u32 [#allocation7], 4
      %s48 = int_to_ptr.vmem [resolvable:$true] %s47
      %53 = dma.hbm_to_vmem [thread:$0]  %s3, 1024, %s48, [#allocation6], 64, 64, 4
    $region17: #{tpu_custom_call.1} parent=1 // pred_fallthru
      _
    // Predicated region
    $region18: #{tpu_custom_call.1} parent=1 // pred_check
      _
    $region19: #{tpu_custom_call.1} parent=1 // pred_check_branch
      %55 = sbr.rel (0) target = $region21
    $region20: #{tpu_custom_call.1} parent=1 // pred_region
      _
    $region21: #{tpu_custom_call.1} parent=1 // pred_fallthru
      _
    // Predicated region
    $region22: #{tpu_custom_call.1} parent=1 // pred_check
      _
    $region23: #{tpu_custom_call.1} parent=1 // pred_check_branch
      %57 = sbr.rel (0) target = $region25
    $region24: #{tpu_custom_call.1} parent=1 // pred_region
      _
    $region25: #{tpu_custom_call.1} parent=1 // pred_fallthru
      _
    // Predicated region
    $region26: #{tpu_custom_call.1} parent=1 // pred_check
      _
    $region27: #{tpu_custom_call.1} parent=1 // pred_check_branch
      %59 = sbr.rel (0) target = $region29
    $region28: #{tpu_custom_call.1} parent=1 // pred_region
      _
    $region29: #{tpu_custom_call.1} parent=1 // pred_fallthru
      _
    // Predicated region
    $region30: #{tpu_custom_call.1} parent=1 // pred_check
      _
    $region31: #{tpu_custom_call.1} parent=1 // pred_check_branch
      %61 = sbr.rel (0) target = $region33
    $region32: #{tpu_custom_call.1} parent=1 // pred_region
      %62 = dma.done [#allocation4], 128
    $region33: #{tpu_custom_call.1} parent=1 // pred_fallthru
      _
    // Predicated region
    $region34: #{tpu_custom_call.1} parent=1 // pred_check
      _
    $region35: #{tpu_custom_call.1} parent=1 // pred_check_branch
      %64 = sbr.rel (0) target = $region37
    $region36: #{tpu_custom_call.1} parent=1 // pred_region
      %65 = dma.done [#allocation6], 256
    $region37: #{tpu_custom_call.1} parent=1 // pred_fallthru
      _
    // Predicated region
    $region38: #{tpu_custom_call.1} parent=1 // pred_check
      _
    $region39: #{tpu_custom_call.1} parent=1 // pred_check_branch
      %67 = sbr.rel (0) target = $region41
    $region40: #{tpu_custom_call.1} parent=1 // pred_region
      %68 = dma.done [#allocation6], 1024
    $region41: #{tpu_custom_call.1} parent=1 // pred_fallthru
      _
    %v70 = vld [vmem:[#allocation3] sm:$0xf]
    %v71 = vld [vmem:[#allocation3 + $0x4] sm:$0xf]
    %v72 = vld [vmem:[#allocation5] sm:$0xf]
    %v73 = vld [vmem:[#allocation5 + $0x4] sm:$0xf]
    %v74 = vld [vmem:[#allocation5 + $0x8] sm:$0xf]
    %v75 = vld [vmem:[#allocation5 + $0xc] sm:$0xf]
    %v76 = vld [vmem:[%s2] sm:$0x1]
    %v78 = vlaneseq
    %v79 = vshrl.u32 %v78, 7
    %v80 = vsub.s32 0, %v79
    %v81 = vrot.slane %v76, %v80
    %v85 = vunpack.c.l.b16 %v70
    %v86 = vunpack.c.l.b16 %v71
    %v87 = vpack.c.b16 %v86, %v85
    %v92 = vunpack.c.l.b16 %v72
    %v93 = vunpack.c.l.b16 %v73
    %v94 = vunpack.c.l.b16 %v74
    %v95 = vunpack.c.l.b16 %v75
    %v96 = vpack.c.b16 %v93, %v92
    %v97 = vpack.c.b16 %v95, %v94
    %vm100 = vcmask 261120
    %v102 = vsel %vm100, %v87, 0
    %104 = vmatprep.subr.bf16.mxu0 0
    %105 = vmatpush1.bf16.msra.mxu0 0
    %106 = vmatprep.subr.bf16.mxu0 0
    %107 = vmatpush1.bf16.msra.mxu0 0
    %108 = vmatprep.subr.bf16.mxu0 0
    %109 = vmatpush1.bf16.msra.mxu0 0
    %110 = vmatprep.subr.bf16.mxu0 0
    %111 = vmatpush1.bf16.msra.mxu0 0
    %112 = vmatprep.subr.bf16.mxu0 0
    %113 = vmatpush1.bf16.msra.mxu0 0
    %114 = vmatprep.subr.bf16.mxu0 0
    %115 = vmatpush1.bf16.msra.mxu0 0
    %116 = vmatprep.subr.bf16.mxu0 0
    %117 = vmatpush1.bf16.msra.mxu0 %v97
    %118 = vmatprep.subr.bf16.mxu0 0
    %119 = vmatpush1.bf16.msra.mxu0 %v96
    %120 = vmatprep.subr.bf16.mxu0 0
    %121 = vmatpush2.bf16.msra.mxu0 0
    %122 = vmatprep.subr.bf16.mxu0 0
    %123 = vmatpush2.bf16.msra.mxu0 0
    %124 = vmatprep.subr.bf16.mxu0 0
    %125 = vmatpush2.bf16.msra.mxu0 0
    %126 = vmatprep.subr.bf16.mxu0 0
    %127 = vmatpush2.bf16.msra.mxu0 0
    %128 = vmatprep.subr.bf16.mxu0 0
    %129 = vmatpush2.bf16.msra.mxu0 0
    %130 = vmatprep.subr.bf16.mxu0 0
    %131 = vmatpush2.bf16.msra.mxu0 0
    %132 = vmatprep.subr.bf16.mxu0 0
    %133 = vmatpush2.bf16.msra.mxu0 0
    %134 = vmatprep.subr.bf16.mxu0 0
    %135 = vmatpush2.bf16.msra.mxu0 0
    %136 = vmatprep.mubr.bf16.mxu0 0
    %137 = vmatmul.mubr.bf16.gmra.mxu0 %v102
    %v138 = vpop.f32.mrf.mxu0
    %v139 = vadd.f32 %v81, %v138
    %v140 = vpop.f32.mrf.mxu0
    %v141 = vpop.f32.mrf.mxu0
    %v142 = vadd.f32 %v81, %v141
    %v143 = vpop.f32.mrf.mxu0
    %144 = vdwg.mxu0
    %v145 = vmax.f32 %v139, 0.0
    %v146 = vmax.f32 %v142, 0.0
    %v147 = vld [vmem:[#allocation7] sm:$0xf]
    %v148 = vld [vmem:[#allocation7 + $0x4] sm:$0xf]
    %v149 = vld [vmem:[#allocation7 + $0x8] sm:$0xf]
    %v150 = vld [vmem:[#allocation7 + $0xc] sm:$0xf]
    %v151 = vld [vmem:[#allocation7 + $0x10] sm:$0xf]
    %v152 = vld [vmem:[#allocation7 + $0x14] sm:$0xf]
    %v153 = vld [vmem:[#allocation7 + $0x18] sm:$0xf]
    %v154 = vld [vmem:[#allocation7 + $0x1c] sm:$0xf]
    %v155 = vld [vmem:[#allocation7 + $0x20] sm:$0xf]
    %v156 = vld [vmem:[#allocation7 + $0x24] sm:$0xf]
    %v157 = vld [vmem:[#allocation7 + $0x28] sm:$0xf]
    %v158 = vld [vmem:[#allocation7 + $0x2c] sm:$0xf]
    %v159 = vld [vmem:[#allocation7 + $0x30] sm:$0xf]
    %v160 = vld [vmem:[#allocation7 + $0x34] sm:$0xf]
    %v161 = vld [vmem:[#allocation7 + $0x38] sm:$0xf]
    %v162 = vld [vmem:[#allocation7 + $0x3c] sm:$0xf]
    %v163 = vld [vmem:[%s4] sm:$0x1]
    %v164 = vpack.c.bf16 %v146, %v145
    %v166 = vlaneseq
    %v167 = vshrl.u32 %v166, 7
    %v168 = vsub.s32 0, %v167
    %v169 = vrot.slane %v163, %v168
    %v187 = vunpack.c.l.b16 %v147
    %v188 = vunpack.c.l.b16 %v148
    %v189 = vunpack.c.l.b16 %v149
    %v190 = vunpack.c.l.b16 %v150
    %v191 = vunpack.c.l.b16 %v151
    %v192 = vunpack.c.l.b16 %v152
    %v193 = vunpack.c.l.b16 %v153
    %v194 = vunpack.c.l.b16 %v154
    %v195 = vunpack.c.l.b16 %v155
    %v196 = vunpack.c.l.b16 %v156
    %v197 = vunpack.c.l.b16 %v157
    %v198 = vunpack.c.l.b16 %v158
    %v199 = vunpack.c.l.b16 %v159
    %v200 = vunpack.c.l.b16 %v160
    %v201 = vunpack.c.l.b16 %v161
    %v202 = vunpack.c.l.b16 %v162
    %v203 = vpack.c.b16 %v188, %v187
    %v204 = vpack.c.b16 %v190, %v189
    %v205 = vpack.c.b16 %v192, %v191
    %v206 = vpack.c.b16 %v194, %v193
    %v207 = vpack.c.b16 %v196, %v195
    %v208 = vpack.c.b16 %v198, %v197
    %v209 = vpack.c.b16 %v200, %v199
    %v210 = vpack.c.b16 %v202, %v201
    %219 = vmatprep.subr.bf16.mxu0 0
    %220 = vmatpush1.bf16.msra.mxu0 %v210
    %221 = vmatprep.subr.bf16.mxu0 0
    %222 = vmatpush1.bf16.msra.mxu0 %v209
    %223 = vmatprep.subr.bf16.mxu0 0
    %224 = vmatpush1.bf16.msra.mxu0 %v208
    %225 = vmatprep.subr.bf16.mxu0 0
    %226 = vmatpush1.bf16.msra.mxu0 %v207
    %227 = vmatprep.subr.bf16.mxu0 0
    %228 = vmatpush1.bf16.msra.mxu0 %v206
    %229 = vmatprep.subr.bf16.mxu0 0
    %230 = vmatpush1.bf16.msra.mxu0 %v205
    %231 = vmatprep.subr.bf16.mxu0 0
    %232 = vmatpush1.bf16.msra.mxu0 %v204
    %233 = vmatprep.subr.bf16.mxu0 0
    %234 = vmatpush1.bf16.msra.mxu0 %v203
    %235 = vmatprep.subr.bf16.mxu0 0
    %236 = vmatpush2.bf16.msra.mxu0 0
    %237 = vmatprep.subr.bf16.mxu0 0
    %238 = vmatpush2.bf16.msra.mxu0 0
    %239 = vmatprep.subr.bf16.mxu0 0
    %240 = vmatpush2.bf16.msra.mxu0 0
    %241 = vmatprep.subr.bf16.mxu0 0
    %242 = vmatpush2.bf16.msra.mxu0 0
    %243 = vmatprep.subr.bf16.mxu0 0
    %244 = vmatpush2.bf16.msra.mxu0 0
    %245 = vmatprep.subr.bf16.mxu0 0
    %246 = vmatpush2.bf16.msra.mxu0 0
    %247 = vmatprep.subr.bf16.mxu0 0
    %248 = vmatpush2.bf16.msra.mxu0 0
    %249 = vmatprep.subr.bf16.mxu0 0
    %250 = vmatpush2.bf16.msra.mxu0 0
    %251 = vmatprep.mubr.bf16.mxu0 0
    %252 = vmatmul.mubr.bf16.gmra.mxu0 %v164
    %v253 = vpop.f32.mrf.mxu0
    %v254 = vadd.f32 %v169, %v253
    %v255 = vpop.f32.mrf.mxu0
    %v256 = vpop.f32.mrf.mxu0
    %v257 = vadd.f32 %v169, %v256
    %v258 = vpop.f32.mrf.mxu0
    %259 = vdwg.mxu0
    %v260 = vmax.f32 %v254, 0.0
    %v261 = vmax.f32 %v257, 0.0
    %v262 = vld [vmem:[%s5] sm:$0x1]
    %v263 = vld [vmem:[#allocation2] sm:$0x1]
    %v265 = vlaneseq
    %v266 = vshrl.u32 %v265, 7
    %v267 = vsub.s32 0, %v266
    %v268 = vrot.slane %v262, %v267
    %v270 = vmul.f32 %v260, %v268
    %v271 = vmul.f32 %v261, %v268
    %272 = vadd.xlane.f32.xlu0 %v270
    %v273 = vpop.xlane.xlu0 %272
    %274 = vadd.xlane.f32.xlu0 %v271
    %v275 = vpop.xlane.xlu0 %274
    %v277 = vlaneseq
    %v278 = vshrl.u32 %v277, 7
    %v279 = vsub.s32 0, %v278
    %v280 = vrot.slane %v263, %v279
    %v282 = vadd.f32 %v273, %v280
    %v283 = vadd.f32 %v275, %v280
    %vm284 = vcmask 7168
    %285 = vst.msk [vmem:[%s7] sm:$0xff] %vm284, %v282
    %286 = vst.msk [vmem:[%s7 + $0x8] sm:$0xff] %vm284, %v283
    // Predicated region
    $region42: #{tpu_custom_call.1} parent=1 // pred_check
      _
    $region43: #{tpu_custom_call.1} parent=1 // pred_check_branch
      %288 = sbr.rel (0) target = $region45
    $region44: #{tpu_custom_call.1} parent=1 // pred_region
      _
    $region45: #{tpu_custom_call.1} parent=1 // pred_fallthru
      _
    // Predicated region
    $region46: #{tpu_custom_call.1} parent=1 // pred_check
      _
    $region47: #{tpu_custom_call.1} parent=1 // pred_check_branch
      %290 = sbr.rel (0) target = $region49
    $region48: #{tpu_custom_call.1} parent=1 // pred_region
      _
    $region49: #{tpu_custom_call.1} parent=1 // pred_fallthru
      _
    %291 = vsyncpa [#allocation4], 1
    %292 = vsyncpa [#allocation6], 1

</llo_original>
